<compile_context>
chip_gen: v5e
topology: v5e:2x2
jax: 0.10.0
libtpu: 0.0.40
codegen_flags: <defaults>
</compile_context>

<pallas_src>
import jax
import jax.numpy as jnp
from jax.experimental import pallas as pl
from jax.experimental.pallas import tpu as pltpu


# ----------------------------- tile planning -------------------------------

def _round_up(v, m):
    return ((v + m - 1) // m) * m


def _largest_divisor_tile(dim, cap, step):
    """Largest multiple of `step` that is <= min(cap, dim) and divides `dim`.
    `dim` must itself be a multiple of `step` (so `step` always qualifies)."""
    t = min(cap, dim)
    t -= t % step
    while t > step and dim % t:
        t -= step
    return t


def _plan_lane_dim(dim, cap, step=128, min_tile=256):
    """Padded size for a lane (last-axis) dimension such that a tile of width
    >= min_tile (and <= cap) divides it exactly.  Done once at prepare time so
    the weight never needs per-call re-padding."""
    d = _round_up(dim, step)
    if d <= cap:
        return d
    if _largest_divisor_tile(d, cap, step) >= min_tile:
        return d
    return _round_up(d, cap)        # pad up so the full-size cap tile divides


def _plan_rows(n, cap, align):
    """(row_tile, padded_rows) for the batch/sublane dimension."""
    n_al = _round_up(n, align)
    if n_al <= cap:
        return n_al, n_al
    t = _largest_divisor_tile(n_al, cap, align)
    if t >= cap // 2:
        return t, n_al
    return cap, _round_up(n_al, cap)


# -------------------------------- kernels ----------------------------------

def _linear_kernel_acc(x_ref, w_ref, b_ref, o_ref, acc_ref):
    """One (tm, tn) output tile of y = x @ w + b, accumulated over K blocks."""
    k = pl.program_id(2)

    @pl.when(k == 0)
    def _init():
        acc_ref[...] = jnp.zeros_like(acc_ref)

    x = x_ref[...]
    if x.dtype != w_ref.dtype:          # in-kernel cast (hidden under DMA)
        x = x.astype(w_ref.dtype)
    acc_ref[...] += jnp.dot(x, w_ref[...], preferred_element_type=jnp.float32)

    @pl.when(k == pl.num_programs(2) - 1)
    def _finalize():
        o_ref[...] = (acc_ref[...] + b_ref[...]).astype(o_ref.dtype)


def _linear_kernel_single_k(x_ref, w_ref, b_ref, o_ref):
    """Specialization for K-grid == 1: no scratch accumulator round-trip."""
    x = x_ref[...]
    if x.dtype != w_ref.dtype:
        x = x.astype(w_ref.dtype)
    o_ref[...] = (jnp.dot(x, w_ref[...], preferred_element_type=jnp.float32)
                  + b_ref[...]).astype(o_ref.dtype)


# ------------------------------ public API ---------------------------------

def prepare_classifier_params(weight, bias, *, param_dtype=None):
    """One-time (load-time) conversion of PyTorch-convention Linear params.

    weight: [C, D] (torch.nn.Linear layout), bias: [C].
    Returns (w_t, b2d, num_classes):
      w_t: [D_pad, C_pad]  transposed, zero-padded weight (classes lane-dense),
                           stored in `param_dtype` (== the compute dtype).
      b2d: [1,  C_pad]     fp32 bias row.
    For inference on v5e/v6e, param_dtype=jnp.bfloat16 halves weight streaming
    at no MXU cost (fp32 accumulation is kept in the kernel).
    """
    C, D = weight.shape
    C_pad = _plan_lane_dim(C, cap=1024, min_tile=256)
    D_pad = _plan_lane_dim(D, cap=512, min_tile=256)
    w = weight if param_dtype is None else weight.astype(param_dtype)
    w_t = jnp.zeros((D_pad, C_pad), w.dtype).at[:D, :C].set(w.T)
    b2d = jnp.zeros((1, C_pad), jnp.float32).at[0, :C].set(
        bias.astype(jnp.float32))
    return w_t, b2d, C


def classifier_forward_prepared(x, w_t, b2d, *, num_classes):
    """y = x @ W.T + b using pre-transposed/padded params from
    prepare_classifier_params.  x: [B, D] -> [B, num_classes].
    Compute dtype == w_t.dtype (no wrapper-side casts)."""
    B, D = x.shape
    D_pad, C_pad = w_t.shape
    assert D <= D_pad and num_classes <= C_pad
    compute_dtype = w_t.dtype
    out_dtype = x.dtype

    # Sublane packing: bf16 packs 2 rows / sublane, 8-bit packs 4.
    w_itemsize = jnp.dtype(compute_dtype).itemsize
    row_align = 8 * max(1, 4 // w_itemsize)

    tm, B_pad = _plan_rows(B, 512, row_align)
    tn = _largest_divisor_tile(C_pad, 1024, 128)
    tk = _largest_divisor_tile(D_pad, 512, 128)

    # v7x megacore: guarantee >= 2 "parallel" output blocks when possible so
    # both TensorCores get work on small-batch inference.
    if B_pad // tm == 1 and C_pad // tn == 1 and C_pad >= 256:
        tn = _largest_divisor_tile(C_pad, C_pad // 2, 128)

    mg, ng, kg = B_pad // tm, C_pad // tn, D_pad // tk

    # Pad x only when its shape is actually unaligned (common backbone dims
    # D=512/768/1024/2048 with aligned B skip this pass entirely).  No cast.
    if (B_pad, D_pad) != (B, D):
        xp = jnp.zeros((B_pad, D_pad), x.dtype).at[:B, :D].set(x)
    else:
        xp = x

    x_itemsize = jnp.dtype(x.dtype).itemsize
    o_itemsize = jnp.dtype(out_dtype).itemsize
    vmem_need = (2 * (tm * tk * x_itemsize + tk * tn * w_itemsize + tn * 4)
                 + 2 * tm * tn * o_itemsize
                 + (tm * tn * 4 if kg > 1 else 0))
    vmem_limit = int(min(64 * 1024 * 1024,
                         max(2 * vmem_need, 32 * 1024 * 1024)))

    cost = pl.CostEstimate(
        flops=2 * B_pad * D_pad * C_pad,
        transcendentals=0,
        bytes_accessed=(B_pad * D_pad * x_itemsize
                        + D_pad * C_pad * w_itemsize
                        + B_pad * C_pad * o_itemsize
                        + C_pad * 4))

    if kg == 1:
        out = pl.pallas_call(
            _linear_kernel_single_k,
            out_shape=jax.ShapeDtypeStruct((B_pad, C_pad), out_dtype),
            grid_spec=pltpu.PrefetchScalarGridSpec(
                num_scalar_prefetch=0,
                grid=(mg, ng),
                in_specs=[
                    pl.BlockSpec((tm, tk), lambda i, j: (i, 0)),   # x tile
                    pl.BlockSpec((tk, tn), lambda i, j: (0, j)),   # w tile
                    pl.BlockSpec((1, tn), lambda i, j: (0, j)),    # bias
                ],
                out_specs=pl.BlockSpec((tm, tn), lambda i, j: (i, j)),
            ),
            compiler_params=pltpu.CompilerParams(
                dimension_semantics=("parallel", "parallel"),
                vmem_limit_bytes=vmem_limit),
            cost_estimate=cost,
        )(xp, w_t, b2d)
    else:
        out = pl.pallas_call(
            _linear_kernel_acc,
            out_shape=jax.ShapeDtypeStruct((B_pad, C_pad), out_dtype),
            grid_spec=pltpu.PrefetchScalarGridSpec(
                num_scalar_prefetch=0,
                grid=(mg, ng, kg),
                in_specs=[
                    pl.BlockSpec((tm, tk), lambda i, j, k: (i, k)),  # x tile
                    pl.BlockSpec((tk, tn), lambda i, j, k: (k, j)),  # w tile
                    pl.BlockSpec((1, tn), lambda i, j, k: (0, j)),   # bias
                ],
                out_specs=pl.BlockSpec((tm, tn), lambda i, j, k: (i, j)),
                scratch_shapes=[pltpu.VMEM((tm, tn), jnp.float32)],
            ),
            compiler_params=pltpu.CompilerParams(
                dimension_semantics=("parallel", "parallel", "arbitrary"),
                vmem_limit_bytes=vmem_limit),
            cost_estimate=cost,
        )(xp, w_t, b2d)

    return out[:B, :num_classes]


def classifier_forward(x, weight, bias, *, param_dtype=None):
    """Equivalent of classifier(model).forward(x) where the wrapped trailing
    child is nn.Linear(D, C).  NOTE: in real use, call
    prepare_classifier_params ONCE at parameter-load time and reuse the
    prepared (w_t, b2d) across forward calls."""
    w_t, b2d, n_cls = prepare_classifier_params(
        weight, bias, param_dtype=param_dtype)
    return classifier_forward_prepared(x, w_t, b2d, num_classes=n_cls)


if __name__ == "__main__":
    key = jax.random.PRNGKey(0)
    fwd = jax.jit(classifier_forward_prepared, static_argnames=("num_classes",))

    # --- Test 1: toy head nn.Linear(128, 32), batch 8, fp32 ---------------
    B, D, C = 8, 128, 32
    k1, k2, k3, key = jax.random.split(key, 4)
    x = jax.random.normal(k1, (B, D), dtype=jnp.float32)
    weight = jax.random.normal(k2, (C, D), dtype=jnp.float32) * 0.05
    bias = jax.random.normal(k3, (C,), dtype=jnp.float32) * 0.05

    w_t, b2d, n_cls = prepare_classifier_params(weight, bias)
    out = jax.block_until_ready(fwd(x, w_t, b2d, num_classes=n_cls))
    ref = x @ weight.T + bias
    assert out.shape == (B, C)
    assert jnp.allclose(out, ref, atol=1e-5, rtol=1e-5), "fp32 toy head mismatch"

    # --- Test 2: unaligned shapes -> padding + multi-tile N/K grid --------
    B2, D2, C2 = 80, 1100, 520
    k1, k2, k3, key = jax.random.split(key, 4)
    x2 = jax.random.normal(k1, (B2, D2), dtype=jnp.float32)
    w2 = jax.random.normal(k2, (C2, D2), dtype=jnp.float32) * 0.05
    b2 = jax.random.normal(k3, (C2,), dtype=jnp.float32) * 0.05
    w_t2, b2d2, n2 = prepare_classifier_params(w2, b2)
    out2 = jax.block_until_ready(fwd(x2, w_t2, b2d2, num_classes=n2))
    ref2 = jax.lax.dot_general(
        x2, w2, (((1,), (1,)), ((), ())),
        precision=jax.lax.Precision.HIGHEST) + b2
    assert out2.shape == (B2, C2)
    assert jnp.allclose(out2, ref2, atol=2e-3, rtol=2e-3), "padded head mismatch"

    # --- Test 3: bf16-prepared weights (cast done ONCE at prepare time) ---
    w_tb, b2db, n_b = prepare_classifier_params(
        weight, bias, param_dtype=jnp.bfloat16)
    out3 = jax.block_until_ready(fwd(x, w_tb, b2db, num_classes=n_b))
    assert jnp.allclose(out3, ref, atol=3e-2, rtol=3e-2), "bf16 head mismatch"

    print("KERNEL_OK")
</pallas_src>

<mosaic_0001>
module attributes {stable_mosaic.version = 11 : i64} {
  func.func @_linear_kernel_single_k(%arg0: i32, %arg1: i32, %arg2: memref<8x128xf32, #tpu.memory_space<vmem>>, %arg3: memref<128x128xf32, #tpu.memory_space<vmem>>, %arg4: memref<1x128xf32, #tpu.memory_space<vmem>>, %arg5: memref<8x128xf32, #tpu.memory_space<vmem>>) attributes {dimension_semantics = [#tpu.dimension_semantics<parallel>, #tpu.dimension_semantics<parallel>], iteration_bounds = array<i64: 1, 1>, scalar_prefetch = 0 : i64, scratch_operands = 0 : i64, tpu.core_type = #tpu.core_type<tc>, window_params = [{transform_indices = @transform_0, window_bounds = array<i64: 8, 128>}, {transform_indices = @transform_1, window_bounds = array<i64: 128, 128>}, {transform_indices = @transform_2, window_bounds = array<i64: 1, 128>}, {transform_indices = @transform_3, window_bounds = array<i64: 8, 128>}]} {
    %c0 = arith.constant 0 : index
    %c0_0 = arith.constant 0 : index
    %0 = vector.load %arg2[%c0, %c0_0] : memref<8x128xf32, #tpu.memory_space<vmem>>, vector<8x128xf32>
    %c0_1 = arith.constant 0 : index
    %c0_2 = arith.constant 0 : index
    %1 = vector.load %arg3[%c0_1, %c0_2] : memref<128x128xf32, #tpu.memory_space<vmem>>, vector<128x128xf32>
    %cst = arith.constant dense<0.000000e+00> : vector<8x128xf32>
    %2 = tpu.matmul %0, %1, %cst {dimension_numbers = #tpu.dot_dimension_numbers<[1], [0], [0], [1], [0, 0, 1, 1], [], []>} : vector<8x128xf32>, vector<128x128xf32>, vector<8x128xf32> -> vector<8x128xf32>
    %c0_3 = arith.constant 0 : index
    %c0_4 = arith.constant 0 : index
    %3 = vector.load %arg4[%c0_3, %c0_4] : memref<1x128xf32, #tpu.memory_space<vmem>>, vector<1x128xf32>
    %4 = vector.broadcast %3 : vector<1x128xf32> to vector<8x128xf32>
    %5 = arith.addf %2, %4 : vector<8x128xf32>
    %c0_5 = arith.constant 0 : index
    %c0_6 = arith.constant 0 : index
    %6 = vector.load %arg5[%c0_5, %c0_6] : memref<8x128xf32, #tpu.memory_space<vmem>>, vector<8x128xf32>
    tpu.vector_store %arg5[%c0_5, %c0_6], %5 {strides = array<i32>} : memref<8x128xf32, #tpu.memory_space<vmem>>, vector<8x128xf32>,
    return
  }
  func.func @transform_0(%arg0: i32, %arg1: i32) -> (i32, i32) {
    %c0_i32 = arith.constant 0 : i32
    %c0_i32_0 = arith.constant 0 : i32
    return %arg0, %c0_i32 : i32, i32
  }
  func.func @transform_1(%arg0: i32, %arg1: i32) -> (i32, i32) {
    %c0_i32 = arith.constant 0 : i32
    %c0_i32_0 = arith.constant 0 : i32
    return %c0_i32, %arg1 : i32, i32
  }
  func.func @transform_2(%arg0: i32, %arg1: i32) -> (i32, i32) {
    %c0_i32 = arith.constant 0 : i32
    %c0_i32_0 = arith.constant 0 : i32
    return %c0_i32, %arg1 : i32, i32
  }
  func.func @transform_3(%arg0: i32, %arg1: i32) -> (i32, i32) {
    %c0_i32 = arith.constant 0 : i32
    return %arg0, %arg1 : i32, i32
  }
}

</mosaic_0001>

<llo_original>
// kernel: classifier_forward_prepared.1
$region0: #{classifier_forward_prepared.1}
  #allocation0 [shape = 'u32[]', space=smem, size = 0x4, offset = 0x4, fixed_abs, tag = 'smem constant byte address 0x4 - core index']
  #allocation1 [shape = 'u32[72,128]{1,0:T(1,128)}', space=vmem, size = 0x9000, scoped, tag = 'internal scratch']
  %s0 = inlined_call_operand.hbm [shape: f32[8,128], index: 0, kind: input, shape index: {}]
  %s1 = inlined_call_operand.hbm [shape: f32[128,128], index: 1, kind: input, shape index: {}]
  %s2 = inlined_call_operand.vmem [shape: f32[1,128], index: 2, kind: input, shape index: {}]
  %s3 = inlined_call_operand.hbm [shape: f32[8,128], index: 3, kind: output, shape index: {}]
  %s4 = sld [smem:[#allocation0]]
  $region30: #{classifier_forward_prepared.1} parent=0
    _
  %s6 = ssub.s32 1, %s4
  %s7 = scalar_select 0, %s6, %s4
  $region1: #{classifier_forward_prepared.1} parent=0
    #allocation2 [shape = 'u8[4096]{0}', space=vmem, size = 0x1000, scoped, tag = 'input window, operand 0, single buffered']
    #allocation3 [shape = 's32[1]{0}', space=sflag, size = 0x4, scoped, tag = 'scoped memory for classifier_forward_prepared.1']
    #allocation4 [shape = 's32[1]{0}', space=sflag, size = 0x4, scoped, tag = 'scoped memory for classifier_forward_prepared.1']
    #allocation5 [shape = 'u8[65536]{0}', space=vmem, size = 0x10000, scoped, tag = 'input window, operand 1, single buffered']
    #allocation6 [shape = 's32[1]{0}', space=sflag, size = 0x4, scoped, tag = 'scoped memory for classifier_forward_prepared.1']
    #allocation7 [shape = 'u8[4096]{0}', space=vmem, size = 0x1000, scoped, tag = 'output window, operand 0, single buffered']
    %8 = vsyncpa [#allocation3], 0
    %9 = vsyncpa [#allocation6], 0
    %10 = vsyncpa [#allocation4], 0
    // Predicated region
    $region2: #{classifier_forward_prepared.1} parent=1 // pred_check
      _
    $region3: #{classifier_forward_prepared.1} parent=1 // pred_check_branch
      %12 = sbr.rel (0) target = $region5
    $region4: #{classifier_forward_prepared.1} parent=1 // pred_region
      %14 = vsyncadd [#allocation3], 0
      %s16 = sshll.u32 %s0, 4
      %s17 = int_to_ptr.hbm [resolvable:$true] %s16
      %s18 = sshll.u32 [#allocation2], 4
      %s19 = int_to_ptr.vmem [resolvable:$true] %s18
      %21 = dma.hbm_to_vmem [thread:$0]  %s17, 128, %s19, [#allocation3]
    $region5: #{classifier_forward_prepared.1} parent=1 // pred_fallthru
      _
    // Predicated region
    $region6: #{classifier_forward_prepared.1} parent=1 // pred_check
      _
    $region7: #{classifier_forward_prepared.1} parent=1 // pred_check_branch
      %23 = sbr.rel (0) target = $region9
    $region8: #{classifier_forward_prepared.1} parent=1 // pred_region
      %25 = vsyncadd [#allocation6], 0
      %s26 = sshll.u32 %s1, 4
      %s27 = int_to_ptr.hbm [resolvable:$true] %s26
      %s28 = sshll.u32 [#allocation5], 4
      %s29 = int_to_ptr.vmem [resolvable:$true] %s28
      %34 = dma.hbm_to_vmem [thread:$0]  %s27, 2048, %s29, [#allocation6], 128, 128, 8
    $region9: #{classifier_forward_prepared.1} parent=1 // pred_fallthru
      _
    // Predicated region
    $region10: #{classifier_forward_prepared.1} parent=1 // pred_check
      _
    $region11: #{classifier_forward_prepared.1} parent=1 // pred_check_branch
      %36 = sbr.rel (0) target = $region13
    $region12: #{classifier_forward_prepared.1} parent=1 // pred_region
      _
    $region13: #{classifier_forward_prepared.1} parent=1 // pred_fallthru
      _
    // Predicated region
    $region14: #{classifier_forward_prepared.1} parent=1 // pred_check
      _
    $region15: #{classifier_forward_prepared.1} parent=1 // pred_check_branch
      %38 = sbr.rel (0) target = $region17
    $region16: #{classifier_forward_prepared.1} parent=1 // pred_region
      %40 = dma.done [#allocation3], 128
    $region17: #{classifier_forward_prepared.1} parent=1 // pred_fallthru
      _
    // Predicated region
    $region18: #{classifier_forward_prepared.1} parent=1 // pred_check
      _
    $region19: #{classifier_forward_prepared.1} parent=1 // pred_check_branch
      %42 = sbr.rel (0) target = $region21
    $region20: #{classifier_forward_prepared.1} parent=1 // pred_region
      %44 = dma.done [#allocation6], 2048
    $region21: #{classifier_forward_prepared.1} parent=1 // pred_fallthru
      _
    %v45 = vld [vmem:[#allocation2] sm:$0xff]
    %v46 = vld [vmem:[#allocation5] sm:$0xff]
    %v47 = vld [vmem:[#allocation5 + $0x8] sm:$0xff]
    %v48 = vld [vmem:[#allocation5 + $0x10] sm:$0xff]
    %v49 = vld [vmem:[#allocation5 + $0x18] sm:$0xff]
    %v50 = vld [vmem:[#allocation5 + $0x20] sm:$0xff]
    %v51 = vld [vmem:[#allocation5 + $0x28] sm:$0xff]
    %v52 = vld [vmem:[#allocation5 + $0x30] sm:$0xff]
    %v53 = vld [vmem:[#allocation5 + $0x38] sm:$0xff]
    %v54 = vld [vmem:[#allocation5 + $0x40] sm:$0xff]
    %v55 = vld [vmem:[#allocation5 + $0x48] sm:$0xff]
    %v56 = vld [vmem:[#allocation5 + $0x50] sm:$0xff]
    %v57 = vld [vmem:[#allocation5 + $0x58] sm:$0xff]
    %v58 = vld [vmem:[#allocation5 + $0x60] sm:$0xff]
    %v59 = vld [vmem:[#allocation5 + $0x68] sm:$0xff]
    %v60 = vld [vmem:[#allocation5 + $0x70] sm:$0xff]
    %v61 = vld [vmem:[#allocation5 + $0x78] sm:$0xff]
    %v62 = vld [vmem:[%s2] sm:$0x1]
    %v64 = vperm.slane %v62, 0
    %66 = vmatpush.msra.mxu0 %v61
    %67 = vmatpush.msra.mxu0 %v60
    %68 = vmatpush.msra.mxu0 %v59
    %69 = vmatpush.msra.mxu0 %v58
    %70 = vmatpush.msra.mxu0 %v57
    %71 = vmatpush.msra.mxu0 %v56
    %72 = vmatpush.msra.mxu0 %v55
    %73 = vmatpush.msra.mxu0 %v54
    %74 = vmatpush.msra.mxu0 %v53
    %75 = vmatpush.msra.mxu0 %v52
    %76 = vmatpush.msra.mxu0 %v51
    %77 = vmatpush.msra.mxu0 %v50
    %78 = vmatpush.msra.mxu0 %v49
    %79 = vmatpush.msra.mxu0 %v48
    %80 = vmatpush.msra.mxu0 %v47
    %81 = vmatpush.msra.mxu0 %v46
    %82 = vmatmul.f32.gmra.mxu0 %v45
    %v83 = vpop.f32.mrf.mxu0
    %v84 = vadd.f32 %v64, %v83
    %85 = vdwg.mxu0
    %86 = vst [vmem:[#allocation7] sm:$0xff] %v84
    // Predicated region
    $region22: #{classifier_forward_prepared.1} parent=1 // pred_check
      _
    $region23: #{classifier_forward_prepared.1} parent=1 // pred_check_branch
      %88 = sbr.rel (0) target = $region25
    $region24: #{classifier_forward_prepared.1} parent=1 // pred_region
      %90 = vsyncadd [#allocation4], 0
      %s92 = sshll.u32 [#allocation7], 4
      %s93 = int_to_ptr.vmem [resolvable:$true] %s92
      %s94 = sshll.u32 %s3, 4
      %s95 = int_to_ptr.hbm [resolvable:$true] %s94
      %97 = dma.vmem_to_hbm [thread:$0]  %s93, 128, %s95, [#allocation4]
    $region25: #{classifier_forward_prepared.1} parent=1 // pred_fallthru
      _
    // Predicated region
    $region26: #{classifier_forward_prepared.1} parent=1 // pred_check
      _
    $region27: #{classifier_forward_prepared.1} parent=1 // pred_check_branch
      %99 = sbr.rel (0) target = $region29
    $region28: #{classifier_forward_prepared.1} parent=1 // pred_region
      %101 = dma.done [#allocation4], 128
    $region29: #{classifier_forward_prepared.1} parent=1 // pred_fallthru
      _
    %102 = vsyncpa [#allocation3], 1
    %103 = vsyncpa [#allocation6], 1
    %104 = vsyncpa [#allocation4], 1

</llo_original>
